<compile_context>
chip_gen: v5e
topology: v5e:2x2
jax: 0.10.0
libtpu: 0.0.40
codegen_flags: <defaults>
</compile_context>

<pallas_src>
import functools
import math

import jax
import jax.numpy as jnp
from jax.experimental import pallas as pl
from jax.experimental.pallas import tpu as pltpu

_EPS = 1e-8
_LANE = 128
_SUBLANE = 8


def _norm_kernel_lane_folded(x_ref, s_ref, st_ref, o_ref, *, inv_red):
    """Block = (rows, M) with M = red*trail folded onto the lane axis.

    The `red` groups live strided (stride = trail) inside the lane axis, so the
    group-wise sum of squares is done as a matmul with a constant 0/1 matrix S
    (M, trail) on the MXU (idle otherwise), and the rsqrt is broadcast back
    with S^T.  Everything that touches the full block stays lane-dense.
    """
    x = x_ref[...]
    xf = x.astype(jnp.float32)
    sq = xf * xf
    # (rows, M) @ (M, trail): per-(row, trail) sum of squares over `red`.
    ssum = jnp.dot(sq, s_ref[...],
                   precision=jax.lax.Precision.HIGHEST,
                   preferred_element_type=jnp.float32)
    inv = jax.lax.rsqrt(ssum * inv_red + _EPS)          # (rows, trail) — EUP
    # (rows, trail) @ (trail, M): broadcast inv back to every `red` position.
    inv_full = jnp.dot(inv, st_ref[...],
                       precision=jax.lax.Precision.HIGHEST,
                       preferred_element_type=jnp.float32)
    o_ref[...] = x * inv_full.astype(x.dtype)


def _norm_kernel_3d(x_ref, o_ref):
    """Block = (rows, red, trail) with trail >= 128: XLU sublane reduce + EUP rsqrt."""
    x = x_ref[...]
    xf = x.astype(jnp.float32)
    ms = jnp.mean(xf * xf, axis=1, keepdims=True)       # (rows, 1, trail)
    inv = jax.lax.rsqrt(ms + _EPS)
    o_ref[...] = x * inv.astype(x.dtype)


def _vmem_budget():
    """(target f32-equivalent tile bytes, vmem_limit_bytes) per chip generation."""
    cap = 0
    try:
        info = pltpu.get_tpu_info()
        cap = int(getattr(info, "vmem_capacity_bytes", 0) or 0)
    except Exception:
        cap = 0
    if cap >= (100 << 20):          # v4/v5e/v6e class: 128 MiB VMEM
        return 8 << 20, 100 << 20
    # v7x (64 MiB per TC) or unknown: stay well under 64 MiB total.
    return 4 << 20, 48 << 20


def _pick_rows(lead: int, row_bytes: int, target_bytes: int, align: int) -> int:
    """Largest row-tile (aligned to `align`) whose f32-equivalent bytes fit the target."""
    if row_bytes * lead <= target_bytes:
        rows = lead
    else:
        rows = max(align, ((target_bytes // max(1, row_bytes)) // align) * align)
        rows = min(rows, lead)
    # Keep >= 2 grid steps on big-enough inputs so both v7x TensorCores get
    # work (one extra ~0.35us step elsewhere — negligible).
    if rows == lead and lead >= max(16, 2 * align):
        half = -(-lead // 2)
        rows = min(lead, -(-half // align) * align)
    return max(1, rows)


def modified_norm(x: jax.Array) -> jax.Array:
    """Pallas TPU impl of ModifiedNorm.forward: x / sqrt(mean(x*x, dim=2, keepdim) + eps)."""
    orig_shape = x.shape
    if x.ndim < 3:
        raise ValueError("ModifiedNorm reduces over dim=2; need ndim >= 3")

    lead = math.prod(orig_shape[:2])
    red = orig_shape[2]
    trail = math.prod(orig_shape[3:])
    m = red * trail
    numel = lead * m
    nbytes = numel * jnp.dtype(x.dtype).itemsize

    target_tile_bytes, vmem_limit = _vmem_budget()

    # Lane-folded path: only when the trailing (lane) width is < 128 AND the
    # constant reduce/broadcast matrices stay small AND at least 8 rows fit.
    s_bytes = 2 * m * trail * 4
    use_folded = (trail < _LANE
                  and s_bytes <= (8 << 20)
                  and _SUBLANE * m * 4 <= target_tile_bytes)

    align = _SUBLANE if use_folded else 1
    rows = _pick_rows(lead, m * 4, target_tile_bytes, align)   # size in f32-equivalent bytes
    grid = (pl.cdiv(lead, rows),)

    compiler_params = pltpu.CompilerParams(
        dimension_semantics=("parallel",),       # independent row blocks
        vmem_limit_bytes=vmem_limit,
    )

    if use_folded:
        x2 = x.reshape(lead, m)
        lane_idx = jnp.arange(m, dtype=jnp.int32) % trail
        s_mat = (lane_idx[:, None] ==
                 jnp.arange(trail, dtype=jnp.int32)[None, :]).astype(jnp.float32)  # (M, trail)
        st_mat = jnp.transpose(s_mat)                                              # (trail, M)

        cost = pl.CostEstimate(
            flops=3 * numel + 4 * numel * trail,
            transcendentals=lead * trail,
            bytes_accessed=2 * nbytes + s_bytes,
        )
        kernel = functools.partial(_norm_kernel_lane_folded, inv_red=1.0 / red)
        out2 = pl.pallas_call(
            kernel,
            out_shape=jax.ShapeDtypeStruct((lead, m), x.dtype),
            grid=grid,
            in_specs=[
                pl.BlockSpec((rows, m), lambda i: (i, 0)),
                pl.BlockSpec((m, trail), lambda i: (0, 0)),    # constant, stays resident
                pl.BlockSpec((trail, m), lambda i: (0, 0)),    # constant, stays resident
            ],
            out_specs=pl.BlockSpec((rows, m), lambda i: (i, 0)),
            compiler_params=compiler_params,
            cost_estimate=cost,
        )(x2, s_mat, st_mat)
        return out2.reshape(orig_shape)

    # Already lane-dense: simple 3-D blocking, reduction fully local to a block.
    x3 = x.reshape(lead, red, trail)
    cost = pl.CostEstimate(
        flops=4 * numel,
        transcendentals=lead * trail,
        bytes_accessed=2 * nbytes,
    )
    out3 = pl.pallas_call(
        _norm_kernel_3d,
        out_shape=jax.ShapeDtypeStruct((lead, red, trail), x.dtype),
        grid=grid,
        in_specs=[pl.BlockSpec((rows, red, trail), lambda i: (i, 0, 0))],
        out_specs=pl.BlockSpec((rows, red, trail), lambda i: (i, 0, 0)),
        compiler_params=compiler_params,
        cost_estimate=cost,
    )(x3)
    return out3.reshape(orig_shape)


def _reference(x):
    return x / jnp.sqrt(jnp.mean(x * x, axis=2, keepdims=True) + _EPS)


if __name__ == "__main__":
    key = jax.random.PRNGKey(0)

    # Primary test: NCHW, batch=2, channels=4, spatial=16x16 (lane-folded path).
    x = jax.random.normal(key, (2, 4, 16, 16), dtype=jnp.float32)
    out = jax.block_until_ready(modified_norm(x))
    assert out.shape == x.shape and out.dtype == x.dtype
    assert jnp.allclose(out, _reference(x), atol=1e-5, rtol=1e-5)

    # Secondary test: trailing dim already lane-dense (>=128) -> 3-D path.
    x2 = jax.random.normal(jax.random.PRNGKey(0), (2, 4, 8, 128), dtype=jnp.float32)
    out2 = jax.block_until_ready(modified_norm(x2))
    assert out2.shape == x2.shape and out2.dtype == x2.dtype
    assert jnp.allclose(out2, _reference(x2), atol=1e-5, rtol=1e-5)

    print("KERNEL_OK")
</pallas_src>

<mosaic_0001>
module attributes {stable_mosaic.version = 11 : i64} {
  func.func @_norm_kernel_lane_folded(%arg0: i32, %arg1: memref<8x256xf32, #tpu.memory_space<vmem>>, %arg2: memref<256x16xf32, #tpu.memory_space<vmem>>, %arg3: memref<16x256xf32, #tpu.memory_space<vmem>>, %arg4: memref<8x256xf32, #tpu.memory_space<vmem>>) attributes {dimension_semantics = [#tpu.dimension_semantics<parallel>], iteration_bounds = array<i64: 1>, scalar_prefetch = 0 : i64, scratch_operands = 0 : i64, tpu.core_type = #tpu.core_type<tc>, window_params = [{transform_indices = @transform_0, window_bounds = array<i64: 8, 256>}, {pipeline_mode = #tpu.pipeline_mode<synchronous>, transform_indices = @transform_1, window_bounds = array<i64: 256, 16>}, {pipeline_mode = #tpu.pipeline_mode<synchronous>, transform_indices = @transform_2, window_bounds = array<i64: 16, 256>}, {transform_indices = @transform_3, window_bounds = array<i64: 8, 256>}]} {
    %c0 = arith.constant 0 : index
    %c0_0 = arith.constant 0 : index
    %0 = vector.load %arg1[%c0, %c0_0] : memref<8x256xf32, #tpu.memory_space<vmem>>, vector<8x256xf32>
    %1 = arith.mulf %0, %0 : vector<8x256xf32>
    %c0_1 = arith.constant 0 : index
    %c0_2 = arith.constant 0 : index
    %2 = vector.load %arg2[%c0_1, %c0_2] : memref<256x16xf32, #tpu.memory_space<vmem>>, vector<256x16xf32>
    %cst = arith.constant dense<0.000000e+00> : vector<8x16xf32>
    %3 = tpu.matmul %1, %2, %cst {dimension_numbers = #tpu.dot_dimension_numbers<[1], [0], [0], [1], [0, 0, 1, 1], [], []>, precision = #tpu.contract_precision<fp32>} : vector<8x256xf32>, vector<256x16xf32>, vector<8x16xf32> -> vector<8x16xf32>
    %cst_3 = arith.constant 6.250000e-02 : f32
    %4 = vector.broadcast %cst_3 : f32 to vector<8x16xf32>
    %5 = arith.mulf %3, %4 : vector<8x16xf32>
    %cst_4 = arith.constant 9.99999993E-9 : f32
    %6 = vector.broadcast %cst_4 : f32 to vector<8x16xf32>
    %7 = arith.addf %5, %6 : vector<8x16xf32>
    %8 = math.rsqrt %7 : vector<8x16xf32>
    %c0_5 = arith.constant 0 : index
    %c0_6 = arith.constant 0 : index
    %9 = vector.load %arg3[%c0_5, %c0_6] : memref<16x256xf32, #tpu.memory_space<vmem>>, vector<16x256xf32>
    %cst_7 = arith.constant dense<0.000000e+00> : vector<8x256xf32>
    %10 = tpu.matmul %8, %9, %cst_7 {dimension_numbers = #tpu.dot_dimension_numbers<[1], [0], [0], [1], [0, 0, 1, 1], [], []>, precision = #tpu.contract_precision<fp32>} : vector<8x16xf32>, vector<16x256xf32>, vector<8x256xf32> -> vector<8x256xf32>
    %11 = arith.mulf %0, %10 : vector<8x256xf32>
    %c0_8 = arith.constant 0 : index
    %c0_9 = arith.constant 0 : index
    %12 = vector.load %arg4[%c0_8, %c0_9] : memref<8x256xf32, #tpu.memory_space<vmem>>, vector<8x256xf32>
    tpu.vector_store %arg4[%c0_8, %c0_9], %11 {strides = array<i32>} : memref<8x256xf32, #tpu.memory_space<vmem>>, vector<8x256xf32>,
    return
  }
  func.func @transform_0(%arg0: i32) -> (i32, i32) {
    %c0_i32 = arith.constant 0 : i32
    %c0_i32_0 = arith.constant 0 : i32
    return %arg0, %c0_i32 : i32, i32
  }
  func.func @transform_1(%arg0: i32) -> (i32, i32) {
    %c0_i32 = arith.constant 0 : i32
    %c0_i32_0 = arith.constant 0 : i32
    %c0_i32_1 = arith.constant 0 : i32
    return %c0_i32, %c0_i32_0 : i32, i32
  }
  func.func @transform_2(%arg0: i32) -> (i32, i32) {
    %c0_i32 = arith.constant 0 : i32
    %c0_i32_0 = arith.constant 0 : i32
    %c0_i32_1 = arith.constant 0 : i32
    return %c0_i32, %c0_i32_0 : i32, i32
  }
  func.func @transform_3(%arg0: i32) -> (i32, i32) {
    %c0_i32 = arith.constant 0 : i32
    %c0_i32_0 = arith.constant 0 : i32
    return %arg0, %c0_i32 : i32, i32
  }
}

</mosaic_0001>

<llo_original>
// kernel: tpu_custom_call.1
$region0: #{tpu_custom_call.1}
  #allocation0 [shape = 'u32[]', space=smem, size = 0x4, offset = 0x4, fixed_abs, tag = 'smem constant byte address 0x4 - core index']
  #allocation1 [shape = 'u32[72,128]{1,0:T(1,128)}', space=vmem, size = 0x9000, scoped, tag = 'internal scratch']
  %s0 = inlined_call_operand.vmem [shape: f32[8,256], index: 0, kind: input, shape index: {}]
  %s1 = inlined_call_operand.vmem [shape: f32[256,16], index: 1, kind: input, shape index: {}]
  %s2 = inlined_call_operand.vmem [shape: f32[16,256], index: 2, kind: input, shape index: {}]
  %s3 = inlined_call_operand.hbm [shape: f32[8,256], index: 3, kind: output, shape index: {}]
  %s4 = sld [smem:[#allocation0]]
  $region22: #{tpu_custom_call.1} parent=0
    _
  %s6 = ssub.s32 1, %s4
  %s7 = scalar_select 0, %s6, %s4
  $region1: #{tpu_custom_call.1} parent=0
    #allocation2 [shape = 'u8[8192]{0}', space=vmem, size = 0x2000, scoped, tag = 'output window, operand 0, single buffered']
    #allocation3 [shape = 's32[1]{0}', space=sflag, size = 0x4, scoped, tag = 'scoped memory for tpu_custom_call.1']
    %8 = vsyncpa [#allocation3], 0
    // Predicated region
    $region2: #{tpu_custom_call.1} parent=1 // pred_check
      _
    $region3: #{tpu_custom_call.1} parent=1 // pred_check_branch
      %10 = sbr.rel (0) target = $region5
    $region4: #{tpu_custom_call.1} parent=1 // pred_region
      _
    $region5: #{tpu_custom_call.1} parent=1 // pred_fallthru
      _
    // Predicated region
    $region6: #{tpu_custom_call.1} parent=1 // pred_check
      _
    $region7: #{tpu_custom_call.1} parent=1 // pred_check_branch
      %12 = sbr.rel (0) target = $region9
    $region8: #{tpu_custom_call.1} parent=1 // pred_region
      _
    $region9: #{tpu_custom_call.1} parent=1 // pred_fallthru
      _
    // Predicated region
    $region10: #{tpu_custom_call.1} parent=1 // pred_check
      _
    $region11: #{tpu_custom_call.1} parent=1 // pred_check_branch
      %14 = sbr.rel (0) target = $region13
    $region12: #{tpu_custom_call.1} parent=1 // pred_region
      _
    $region13: #{tpu_custom_call.1} parent=1 // pred_fallthru
      _
    %v15 = vld [vmem:[%s0] sm:$0xff]
    %v16 = vld [vmem:[%s0 + $0x8] sm:$0xff]
    %v17 = vmul.f32 %v15, %v15
    %v18 = vmul.f32 %v16, %v16
    %v19 = vld [vmem:[%s1] sm:$0xff]
    %v20 = vld [vmem:[%s1 + $0x8] sm:$0xff]
    %v21 = vld [vmem:[%s1 + $0x10] sm:$0xff]
    %v22 = vld [vmem:[%s1 + $0x18] sm:$0xff]
    %v23 = vld [vmem:[%s1 + $0x20] sm:$0xff]
    %v24 = vld [vmem:[%s1 + $0x28] sm:$0xff]
    %v25 = vld [vmem:[%s1 + $0x30] sm:$0xff]
    %v26 = vld [vmem:[%s1 + $0x38] sm:$0xff]
    %v27 = vld [vmem:[%s1 + $0x40] sm:$0xff]
    %v28 = vld [vmem:[%s1 + $0x48] sm:$0xff]
    %v29 = vld [vmem:[%s1 + $0x50] sm:$0xff]
    %v30 = vld [vmem:[%s1 + $0x58] sm:$0xff]
    %v31 = vld [vmem:[%s1 + $0x60] sm:$0xff]
    %v32 = vld [vmem:[%s1 + $0x68] sm:$0xff]
    %v33 = vld [vmem:[%s1 + $0x70] sm:$0xff]
    %v34 = vld [vmem:[%s1 + $0x78] sm:$0xff]
    %v35 = vld [vmem:[%s1 + $0x80] sm:$0xff]
    %v36 = vld [vmem:[%s1 + $0x88] sm:$0xff]
    %v37 = vld [vmem:[%s1 + $0x90] sm:$0xff]
    %v38 = vld [vmem:[%s1 + $0x98] sm:$0xff]
    %v39 = vld [vmem:[%s1 + $0xa0] sm:$0xff]
    %v40 = vld [vmem:[%s1 + $0xa8] sm:$0xff]
    %v41 = vld [vmem:[%s1 + $0xb0] sm:$0xff]
    %v42 = vld [vmem:[%s1 + $0xb8] sm:$0xff]
    %v43 = vld [vmem:[%s1 + $0xc0] sm:$0xff]
    %v44 = vld [vmem:[%s1 + $0xc8] sm:$0xff]
    %v45 = vld [vmem:[%s1 + $0xd0] sm:$0xff]
    %v46 = vld [vmem:[%s1 + $0xd8] sm:$0xff]
    %v47 = vld [vmem:[%s1 + $0xe0] sm:$0xff]
    %v48 = vld [vmem:[%s1 + $0xe8] sm:$0xff]
    %v49 = vld [vmem:[%s1 + $0xf0] sm:$0xff]
    %v50 = vld [vmem:[%s1 + $0xf8] sm:$0xff]
    %v51 = vand.u32 %v34, 4294901760
    %52 = vmatpush.msra.mxu0 %v51
    %v53 = vand.u32 %v33, 4294901760
    %54 = vmatpush.msra.mxu0 %v53
    %v55 = vand.u32 %v32, 4294901760
    %56 = vmatpush.msra.mxu0 %v55
    %v57 = vand.u32 %v31, 4294901760
    %58 = vmatpush.msra.mxu0 %v57
    %v59 = vand.u32 %v30, 4294901760
    %60 = vmatpush.msra.mxu0 %v59
    %v61 = vand.u32 %v29, 4294901760
    %62 = vmatpush.msra.mxu0 %v61
    %v63 = vand.u32 %v28, 4294901760
    %64 = vmatpush.msra.mxu0 %v63
    %v65 = vand.u32 %v27, 4294901760
    %66 = vmatpush.msra.mxu0 %v65
    %v67 = vand.u32 %v26, 4294901760
    %68 = vmatpush.msra.mxu0 %v67
    %v69 = vand.u32 %v25, 4294901760
    %70 = vmatpush.msra.mxu0 %v69
    %v71 = vand.u32 %v24, 4294901760
    %72 = vmatpush.msra.mxu0 %v71
    %v73 = vand.u32 %v23, 4294901760
    %74 = vmatpush.msra.mxu0 %v73
    %v75 = vand.u32 %v22, 4294901760
    %76 = vmatpush.msra.mxu0 %v75
    %v77 = vand.u32 %v21, 4294901760
    %78 = vmatpush.msra.mxu0 %v77
    %v79 = vand.u32 %v20, 4294901760
    %80 = vmatpush.msra.mxu0 %v79
    %v81 = vand.u32 %v19, 4294901760
    %82 = vmatpush.msra.mxu0 %v81
    %v83 = vand.u32 %v17, 4294901760
    %v84 = vsub.f32 %v17, %v83
    %v85 = vand.u32 %v84, 4294901760
    %v86 = vsub.f32 %v84, %v85
    %v87 = vand.u32 %v86, 4294901760
    %88 = vmatmul.f32.gmra.mxu0 %v87
    %v89 = vpop.f32.mrf.mxu0
    %v90 = vadd.f32 0.0, %v89
    %91 = vdwg.mxu0
    %v92 = vand.u32 %v34, 4294901760
    %v93 = vsub.f32 %v34, %v92
    %v94 = vand.u32 %v93, 4294901760
    %v95 = vsub.f32 %v93, %v94
    %v96 = vand.u32 %v95, 4294901760
    %97 = vmatpush.msra.mxu0 %v96
    %v98 = vand.u32 %v33, 4294901760
    %v99 = vsub.f32 %v33, %v98
    %v100 = vand.u32 %v99, 4294901760
    %v101 = vsub.f32 %v99, %v100
    %v102 = vand.u32 %v101, 4294901760
    %103 = vmatpush.msra.mxu0 %v102
    %v104 = vand.u32 %v32, 4294901760
    %v105 = vsub.f32 %v32, %v104
    %v106 = vand.u32 %v105, 4294901760
    %v107 = vsub.f32 %v105, %v106
    %v108 = vand.u32 %v107, 4294901760
    %109 = vmatpush.msra.mxu0 %v108
    %v110 = vand.u32 %v31, 4294901760
    %v111 = vsub.f32 %v31, %v110
    %v112 = vand.u32 %v111, 4294901760
    %v113 = vsub.f32 %v111, %v112
    %v114 = vand.u32 %v113, 4294901760
    %115 = vmatpush.msra.mxu0 %v114
    %v116 = vand.u32 %v30, 4294901760
    %v117 = vsub.f32 %v30, %v116
    %v118 = vand.u32 %v117, 4294901760
    %v119 = vsub.f32 %v117, %v118
    %v120 = vand.u32 %v119, 4294901760
    %121 = vmatpush.msra.mxu0 %v120
    %v122 = vand.u32 %v29, 4294901760
    %v123 = vsub.f32 %v29, %v122
    %v124 = vand.u32 %v123, 4294901760
    %v125 = vsub.f32 %v123, %v124
    %v126 = vand.u32 %v125, 4294901760
    %127 = vmatpush.msra.mxu0 %v126
    %v128 = vand.u32 %v28, 4294901760
    %v129 = vsub.f32 %v28, %v128
    %v130 = vand.u32 %v129, 4294901760
    %v131 = vsub.f32 %v129, %v130
    %v132 = vand.u32 %v131, 4294901760
    %133 = vmatpush.msra.mxu0 %v132
    %v134 = vand.u32 %v27, 4294901760
    %v135 = vsub.f32 %v27, %v134
    %v136 = vand.u32 %v135, 4294901760
    %v137 = vsub.f32 %v135, %v136
    %v138 = vand.u32 %v137, 4294901760
    %139 = vmatpush.msra.mxu0 %v138
    %v140 = vand.u32 %v26, 4294901760
    %v141 = vsub.f32 %v26, %v140
    %v142 = vand.u32 %v141, 4294901760
    %v143 = vsub.f32 %v141, %v142
    %v144 = vand.u32 %v143, 4294901760
    %145 = vmatpush.msra.mxu0 %v144
    %v146 = vand.u32 %v25, 4294901760
    %v147 = vsub.f32 %v25, %v146
    %v148 = vand.u32 %v147, 4294901760
    %v149 = vsub.f32 %v147, %v148
    %v150 = vand.u32 %v149, 4294901760
    %151 = vmatpush.msra.mxu0 %v150
    %v152 = vand.u32 %v24, 4294901760
    %v153 = vsub.f32 %v24, %v152
    %v154 = vand.u32 %v153, 4294901760
    %v155 = vsub.f32 %v153, %v154
    %v156 = vand.u32 %v155, 4294901760
    %157 = vmatpush.msra.mxu0 %v156
    %v158 = vand.u32 %v23, 4294901760
    %v159 = vsub.f32 %v23, %v158
    %v160 = vand.u32 %v159, 4294901760
    %v161 = vsub.f32 %v159, %v160
    %v162 = vand.u32 %v161, 4294901760
    %163 = vmatpush.msra.mxu0 %v162
    %v164 = vand.u32 %v22, 4294901760
    %v165 = vsub.f32 %v22, %v164
    %v166 = vand.u32 %v165, 4294901760
    %v167 = vsub.f32 %v165, %v166
    %v168 = vand.u32 %v167, 4294901760
    %169 = vmatpush.msra.mxu0 %v168
    %v170 = vand.u32 %v21, 4294901760
    %v171 = vsub.f32 %v21, %v170
    %v172 = vand.u32 %v171, 4294901760
    %v173 = vsub.f32 %v171, %v172
    %v174 = vand.u32 %v173, 4294901760
    %175 = vmatpush.msra.mxu0 %v174
    %v176 = vand.u32 %v20, 4294901760
    %v177 = vsub.f32 %v20, %v176
    %v178 = vand.u32 %v177, 4294901760
    %v179 = vsub.f32 %v177, %v178
    %v180 = vand.u32 %v179, 4294901760
    %181 = vmatpush.msra.mxu0 %v180
    %v182 = vand.u32 %v19, 4294901760
    %v183 = vsub.f32 %v19, %v182
    %v184 = vand.u32 %v183, 4294901760
    %v185 = vsub.f32 %v183, %v184
    %v186 = vand.u32 %v185, 4294901760
    %187 = vmatpush.msra.mxu0 %v186
    %v188 = vand.u32 %v17, 4294901760
    %189 = vmatmul.f32.gmra.mxu0 %v188
    %v190 = vpop.f32.mrf.mxu0
    %v191 = vadd.f32 %v90, %v190
    %192 = vdwg.mxu0
    %v193 = vand.u32 %v34, 4294901760
    %v194 = vsub.f32 %v34, %v193
    %195 = vmatpush.msra.mxu0 %v194
    %v196 = vand.u32 %v33, 4294901760
    %v197 = vsub.f32 %v33, %v196
    %198 = vmatpush.msra.mxu0 %v197
    %v199 = vand.u32 %v32, 4294901760
    %v200 = vsub.f32 %v32, %v199
    %201 = vmatpush.msra.mxu0 %v200
    %v202 = vand.u32 %v31, 4294901760
    %v203 = vsub.f32 %v31, %v202
    %204 = vmatpush.msra.mxu0 %v203
    %v205 = vand.u32 %v30, 4294901760
    %v206 = vsub.f32 %v30, %v205
    %207 = vmatpush.msra.mxu0 %v206
    %v208 = vand.u32 %v29, 4294901760
    %v209 = vsub.f32 %v29, %v208
    %210 = vmatpush.msra.mxu0 %v209
    %v211 = vand.u32 %v28, 4294901760
    %v212 = vsub.f32 %v28, %v211
    %213 = vmatpush.msra.mxu0 %v212
    %v214 = vand.u32 %v27, 4294901760
    %v215 = vsub.f32 %v27, %v214
    %216 = vmatpush.msra.mxu0 %v215
    %v217 = vand.u32 %v26, 4294901760
    %v218 = vsub.f32 %v26, %v217
    %219 = vmatpush.msra.mxu0 %v218
    %v220 = vand.u32 %v25, 4294901760
    %v221 = vsub.f32 %v25, %v220
    %222 = vmatpush.msra.mxu0 %v221
    %v223 = vand.u32 %v24, 4294901760
    %v224 = vsub.f32 %v24, %v223
    %225 = vmatpush.msra.mxu0 %v224
    %v226 = vand.u32 %v23, 4294901760
    %v227 = vsub.f32 %v23, %v226
    %228 = vmatpush.msra.mxu0 %v227
    %v229 = vand.u32 %v22, 4294901760
    %v230 = vsub.f32 %v22, %v229
    %231 = vmatpush.msra.mxu0 %v230
    %v232 = vand.u32 %v21, 4294901760
    %v233 = vsub.f32 %v21, %v232
    %234 = vmatpush.msra.mxu0 %v233
    %v235 = vand.u32 %v20, 4294901760
    %v236 = vsub.f32 %v20, %v235
    %237 = vmatpush.msra.mxu0 %v236
    %v238 = vand.u32 %v19, 4294901760
    %v239 = vsub.f32 %v19, %v238
    %240 = vmatpush.msra.mxu0 %v239
    %v241 = vand.u32 %v17, 4294901760
    %v242 = vsub.f32 %v17, %v241
    %243 = vmatmul.f32.gmra.mxu0 %v242
    %v244 = vpop.f32.mrf.mxu0
    %v245 = vadd.f32 %v191, %v244
    %246 = vdwg.mxu0
    %v247 = vand.u32 %v34, 4294901760
    %248 = vmatpush.msra.mxu0 %v247
    %v249 = vand.u32 %v33, 4294901760
    %250 = vmatpush.msra.mxu0 %v249
    %v251 = vand.u32 %v32, 4294901760
    %252 = vmatpush.msra.mxu0 %v251
    %v253 = vand.u32 %v31, 4294901760
    %254 = vmatpush.msra.mxu0 %v253
    %v255 = vand.u32 %v30, 4294901760
    %256 = vmatpush.msra.mxu0 %v255
    %v257 = vand.u32 %v29, 4294901760
    %258 = vmatpush.msra.mxu0 %v257
    %v259 = vand.u32 %v28, 4294901760
    %260 = vmatpush.msra.mxu0 %v259
    %v261 = vand.u32 %v27, 4294901760
    %262 = vmatpush.msra.mxu0 %v261
    %v263 = vand.u32 %v26, 4294901760
    %264 = vmatpush.msra.mxu0 %v263
    %v265 = vand.u32 %v25, 4294901760
    %266 = vmatpush.msra.mxu0 %v265
    %v267 = vand.u32 %v24, 4294901760
    %268 = vmatpush.msra.mxu0 %v267
    %v269 = vand.u32 %v23, 4294901760
    %270 = vmatpush.msra.mxu0 %v269
    %v271 = vand.u32 %v22, 4294901760
    %272 = vmatpush.msra.mxu0 %v271
    %v273 = vand.u32 %v21, 4294901760
    %274 = vmatpush.msra.mxu0 %v273
    %v275 = vand.u32 %v20, 4294901760
    %276 = vmatpush.msra.mxu0 %v275
    %v277 = vand.u32 %v19, 4294901760
    %278 = vmatpush.msra.mxu0 %v277
    %v279 = vand.u32 %v17, 4294901760
    %v280 = vsub.f32 %v17, %v279
    %v281 = vand.u32 %v280, 4294901760
    %282 = vmatmul.f32.gmra.mxu0 %v281
    %v283 = vpop.f32.mrf.mxu0
    %v284 = vadd.f32 %v245, %v283
    %285 = vdwg.mxu0
    %v286 = vand.u32 %v34, 4294901760
    %v287 = vsub.f32 %v34, %v286
    %v288 = vand.u32 %v287, 4294901760
    %289 = vmatpush.msra.mxu0 %v288
    %v290 = vand.u32 %v33, 4294901760
    %v291 = vsub.f32 %v33, %v290
    %v292 = vand.u32 %v291, 4294901760
    %293 = vmatpush.msra.mxu0 %v292
    %v294 = vand.u32 %v32, 4294901760
    %v295 = vsub.f32 %v32, %v294
    %v296 = vand.u32 %v295, 4294901760
    %297 = vmatpush.msra.mxu0 %v296
    %v298 = vand.u32 %v31, 4294901760
    %v299 = vsub.f32 %v31, %v298
    %v300 = vand.u32 %v299, 4294901760
    %301 = vmatpush.msra.mxu0 %v300
    %v302 = vand.u32 %v30, 4294901760
    %v303 = vsub.f32 %v30, %v302
    %v304 = vand.u32 %v303, 4294901760
    %305 = vmatpush.msra.mxu0 %v304
    %v306 = vand.u32 %v29, 4294901760
    %v307 = vsub.f32 %v29, %v306
    %v308 = vand.u32 %v307, 4294901760
    %309 = vmatpush.msra.mxu0 %v308
    %v310 = vand.u32 %v28, 4294901760
    %v311 = vsub.f32 %v28, %v310
    %v312 = vand.u32 %v311, 4294901760
    %313 = vmatpush.msra.mxu0 %v312
    %v314 = vand.u32 %v27, 4294901760
    %v315 = vsub.f32 %v27, %v314
    %v316 = vand.u32 %v315, 4294901760
    %317 = vmatpush.msra.mxu0 %v316
    %v318 = vand.u32 %v26, 4294901760
    %v319 = vsub.f32 %v26, %v318
    %v320 = vand.u32 %v319, 4294901760
    %321 = vmatpush.msra.mxu0 %v320
    %v322 = vand.u32 %v25, 4294901760
    %v323 = vsub.f32 %v25, %v322
    %v324 = vand.u32 %v323, 4294901760
    %325 = vmatpush.msra.mxu0 %v324
    %v326 = vand.u32 %v24, 4294901760
    %v327 = vsub.f32 %v24, %v326
    %v328 = vand.u32 %v327, 4294901760
    %329 = vmatpush.msra.mxu0 %v328
    %v330 = vand.u32 %v23, 4294901760
    %v331 = vsub.f32 %v23, %v330
    %v332 = vand.u32 %v331, 4294901760
    %333 = vmatpush.msra.mxu0 %v332
    %v334 = vand.u32 %v22, 4294901760
    %v335 = vsub.f32 %v22, %v334
    %v336 = vand.u32 %v335, 4294901760
    %337 = vmatpush.msra.mxu0 %v336
    %v338 = vand.u32 %v21, 4294901760
    %v339 = vsub.f32 %v21, %v338
    %v340 = vand.u32 %v339, 4294901760
    %341 = vmatpush.msra.mxu0 %v340
    %v342 = vand.u32 %v20, 4294901760
    %v343 = vsub.f32 %v20, %v342
    %v344 = vand.u32 %v343, 4294901760
    %345 = vmatpush.msra.mxu0 %v344
    %v346 = vand.u32 %v19, 4294901760
    %v347 = vsub.f32 %v19, %v346
    %v348 = vand.u32 %v347, 4294901760
    %349 = vmatpush.msra.mxu0 %v348
    %v350 = vand.u32 %v17, 4294901760
    %351 = vmatmul.f32.gmra.mxu0 %v350
    %v352 = vpop.f32.mrf.mxu0
    %v353 = vadd.f32 %v284, %v352
    %354 = vdwg.mxu0
    %v355 = vand.u32 %v34, 4294901760
    %356 = vmatpush.msra.mxu0 %v355
    %v357 = vand.u32 %v33, 4294901760
    %358 = vmatpush.msra.mxu0 %v357
    %v359 = vand.u32 %v32, 4294901760
    %360 = vmatpush.msra.mxu0 %v359
    %v361 = vand.u32 %v31, 4294901760
    %362 = vmatpush.msra.mxu0 %v361
    %v363 = vand.u32 %v30, 4294901760
    %364 = vmatpush.msra.mxu0 %v363
    %v365 = vand.u32 %v29, 4294901760
    %366 = vmatpush.msra.mxu0 %v365
    %v367 = vand.u32 %v28, 4294901760
    %368 = vmatpush.msra.mxu0 %v367
    %v369 = vand.u32 %v27, 4294901760
    %370 = vmatpush.msra.mxu0 %v369
    %v371 = vand.u32 %v26, 4294901760
    %372 = vmatpush.msra.mxu0 %v371
    %v373 = vand.u32 %v25, 4294901760
    %374 = vmatpush.msra.mxu0 %v373
    %v375 = vand.u32 %v24, 4294901760
    %376 = vmatpush.msra.mxu0 %v375
    %v377 = vand.u32 %v23, 4294901760
    %378 = vmatpush.msra.mxu0 %v377
    %v379 = vand.u32 %v22, 4294901760
    %380 = vmatpush.msra.mxu0 %v379
    %v381 = vand.u32 %v21, 4294901760
    %382 = vmatpush.msra.mxu0 %v381
    %v383 = vand.u32 %v20, 4294901760
    %384 = vmatpush.msra.mxu0 %v383
    %v385 = vand.u32 %v19, 4294901760
    %386 = vmatpush.msra.mxu0 %v385
    %v387 = vand.u32 %v17, 4294901760
    %388 = vmatmul.f32.gmra.mxu0 %v387
    %v389 = vpop.f32.mrf.mxu0
    %v390 = vadd.f32 %v353, %v389
    %391 = vdwg.mxu0
    %v392 = vand.u32 %v50, 4294901760
    %393 = vmatpush.msra.mxu0 %v392
    %v394 = vand.u32 %v49, 4294901760
    %395 = vmatpush.msra.mxu0 %v394
    %v396 = vand.u32 %v48, 4294901760
    %397 = vmatpush.msra.mxu0 %v396
    %v398 = vand.u32 %v47, 4294901760
    %399 = vmatpush.msra.mxu0 %v398
    %v400 = vand.u32 %v46, 4294901760
    %401 = vmatpush.msra.mxu0 %v400
    %v402 = vand.u32 %v45, 4294901760
    %403 = vmatpush.msra.mxu0 %v402
    %v404 = vand.u32 %v44, 4294901760
    %405 = vmatpush.msra.mxu0 %v404
    %v406 = vand.u32 %v43, 4294901760
    %407 = vmatpush.msra.mxu0 %v406
    %v408 = vand.u32 %v42, 4294901760
    %409 = vmatpush.msra.mxu0 %v408
    %v410 = vand.u32 %v41, 4294901760
    %411 = vmatpush.msra.mxu0 %v410
    %v412 = vand.u32 %v40, 4294901760
    %413 = vmatpush.msra.mxu0 %v412
    %v414 = vand.u32 %v39, 4294901760
    %415 = vmatpush.msra.mxu0 %v414
    %v416 = vand.u32 %v38, 4294901760
    %417 = vmatpush.msra.mxu0 %v416
    %v418 = vand.u32 %v37, 4294901760
    %419 = vmatpush.msra.mxu0 %v418
    %v420 = vand.u32 %v36, 4294901760
    %421 = vmatpush.msra.mxu0 %v420
    %v422 = vand.u32 %v35, 4294901760
    %423 = vmatpush.msra.mxu0 %v422
    %v424 = vand.u32 %v18, 4294901760
    %v425 = vsub.f32 %v18, %v424
    %v426 = vand.u32 %v425, 4294901760
    %v427 = vsub.f32 %v425, %v426
    %v428 = vand.u32 %v427, 4294901760
    %429 = vmatmul.f32.gmra.mxu0 %v428
    %v430 = vpop.f32.mrf.mxu0
    %v431 = vadd.f32 %v390, %v430
    %432 = vdwg.mxu0
    %v433 = vand.u32 %v50, 4294901760
    %v434 = vsub.f32 %v50, %v433
    %v435 = vand.u32 %v434, 4294901760
    %v436 = vsub.f32 %v434, %v435
    %v437 = vand.u32 %v436, 4294901760
    %438 = vmatpush.msra.mxu0 %v437
    %v439 = vand.u32 %v49, 4294901760
    %v440 = vsub.f32 %v49, %v439
    %v441 = vand.u32 %v440, 4294901760
    %v442 = vsub.f32 %v440, %v441
    %v443 = vand.u32 %v442, 4294901760
    %444 = vmatpush.msra.mxu0 %v443
    %v445 = vand.u32 %v48, 4294901760
    %v446 = vsub.f32 %v48, %v445
    %v447 = vand.u32 %v446, 4294901760
    %v448 = vsub.f32 %v446, %v447
    %v449 = vand.u32 %v448, 4294901760
    %450 = vmatpush.msra.mxu0 %v449
    %v451 = vand.u32 %v47, 4294901760
    %v452 = vsub.f32 %v47, %v451
    %v453 = vand.u32 %v452, 4294901760
    %v454 = vsub.f32 %v452, %v453
    %v455 = vand.u32 %v454, 4294901760
    %456 = vmatpush.msra.mxu0 %v455
    %v457 = vand.u32 %v46, 4294901760
    %v458 = vsub.f32 %v46, %v457
    %v459 = vand.u32 %v458, 4294901760
    %v460 = vsub.f32 %v458, %v459
    %v461 = vand.u32 %v460, 4294901760
    %462 = vmatpush.msra.mxu0 %v461
    %v463 = vand.u32 %v45, 4294901760
    %v464 = vsub.f32 %v45, %v463
    %v465 = vand.u32 %v464, 4294901760
    %v466 = vsub.f32 %v464, %v465
    %v467 = vand.u32 %v466, 4294901760
    %468 = vmatpush.msra.mxu0 %v467
    %v469 = vand.u32 %v44, 4294901760
    %v470 = vsub.f32 %v44, %v469
    %v471 = vand.u32 %v470, 4294901760
    %v472 = vsub.f32 %v470, %v471
    %v473 = vand.u32 %v472, 4294901760
    %474 = vmatpush.msra.mxu0 %v473
    %v475 = vand.u32 %v43, 4294901760
    %v476 = vsub.f32 %v43, %v475
    %v477 = vand.u32 %v476, 4294901760
    %v478 = vsub.f32 %v476, %v477
    %v479 = vand.u32 %v478, 4294901760
    %480 = vmatpush.msra.mxu0 %v479
    %v481 = vand.u32 %v42, 4294901760
    %v482 = vsub.f32 %v42, %v481
    %v483 = vand.u32 %v482, 4294901760
    %v484 = vsub.f32 %v482, %v483
    %v485 = vand.u32 %v484, 4294901760
    %486 = vmatpush.msra.mxu0 %v485
    %v487 = vand.u32 %v41, 4294901760
    %v488 = vsub.f32 %v41, %v487
    %v489 = vand.u32 %v488, 4294901760
    %v490 = vsub.f32 %v488, %v489
    %v491 = vand.u32 %v490, 4294901760
    %492 = vmatpush.msra.mxu0 %v491
    %v493 = vand.u32 %v40, 4294901760
    %v494 = vsub.f32 %v40, %v493
    %v495 = vand.u32 %v494, 4294901760
    %v496 = vsub.f32 %v494, %v495
    %v497 = vand.u32 %v496, 4294901760
    %498 = vmatpush.msra.mxu0 %v497
    %v499 = vand.u32 %v39, 4294901760
    %v500 = vsub.f32 %v39, %v499
    %v501 = vand.u32 %v500, 4294901760
    %v502 = vsub.f32 %v500, %v501
    %v503 = vand.u32 %v502, 4294901760
    %504 = vmatpush.msra.mxu0 %v503
    %v505 = vand.u32 %v38, 4294901760
    %v506 = vsub.f32 %v38, %v505
    %v507 = vand.u32 %v506, 4294901760
    %v508 = vsub.f32 %v506, %v507
    %v509 = vand.u32 %v508, 4294901760
    %510 = vmatpush.msra.mxu0 %v509
    %v511 = vand.u32 %v37, 4294901760
    %v512 = vsub.f32 %v37, %v511
    %v513 = vand.u32 %v512, 4294901760
    %v514 = vsub.f32 %v512, %v513
    %v515 = vand.u32 %v514, 4294901760
    %516 = vmatpush.msra.mxu0 %v515
    %v517 = vand.u32 %v36, 4294901760
    %v518 = vsub.f32 %v36, %v517
    %v519 = vand.u32 %v518, 4294901760
    %v520 = vsub.f32 %v518, %v519
    %v521 = vand.u32 %v520, 4294901760
    %522 = vmatpush.msra.mxu0 %v521
    %v523 = vand.u32 %v35, 4294901760
    %v524 = vsub.f32 %v35, %v523
    %v525 = vand.u32 %v524, 4294901760
    %v526 = vsub.f32 %v524, %v525
    %v527 = vand.u32 %v526, 4294901760
    %528 = vmatpush.msra.mxu0 %v527
    %v529 = vand.u32 %v18, 4294901760
    %530 = vmatmul.f32.gmra.mxu0 %v529
    %v531 = vpop.f32.mrf.mxu0
    %v532 = vadd.f32 %v431, %v531
    %533 = vdwg.mxu0
    %v534 = vand.u32 %v50, 4294901760
    %v535 = vsub.f32 %v50, %v534
    %536 = vmatpush.msra.mxu0 %v535
    %v537 = vand.u32 %v49, 4294901760
    %v538 = vsub.f32 %v49, %v537
    %539 = vmatpush.msra.mxu0 %v538
    %v540 = vand.u32 %v48, 4294901760
    %v541 = vsub.f32 %v48, %v540
    %542 = vmatpush.msra.mxu0 %v541
    %v543 = vand.u32 %v47, 4294901760
    %v544 = vsub.f32 %v47, %v543
    %545 = vmatpush.msra.mxu0 %v544
    %v546 = vand.u32 %v46, 4294901760
    %v547 = vsub.f32 %v46, %v546
    %548 = vmatpush.msra.mxu0 %v547
    %v549 = vand.u32 %v45, 4294901760
    %v550 = vsub.f32 %v45, %v549
    %551 = vmatpush.msra.mxu0 %v550
    %v552 = vand.u32 %v44, 4294901760
    %v553 = vsub.f32 %v44, %v552
    %554 = vmatpush.msra.mxu0 %v553
    %v555 = vand.u32 %v43, 4294901760
    %v556 = vsub.f32 %v43, %v555
    %557 = vmatpush.msra.mxu0 %v556
    %v558 = vand.u32 %v42, 4294901760
    %v559 = vsub.f32 %v42, %v558
    %560 = vmatpush.msra.mxu0 %v559
    %v561 = vand.u32 %v41, 4294901760
    %v562 = vsub.f32 %v41, %v561
    %563 = vmatpush.msra.mxu0 %v562
    %v564 = vand.u32 %v40, 4294901760
    %v565 = vsub.f32 %v40, %v564
    %566 = vmatpush.msra.mxu0 %v565
    %v567 = vand.u32 %v39, 4294901760
    %v568 = vsub.f32 %v39, %v567
    %569 = vmatpush.msra.mxu0 %v568
    %v570 = vand.u32 %v38, 4294901760
    %v571 = vsub.f32 %v38, %v570
    %572 = vmatpush.msra.mxu0 %v571
    %v573 = vand.u32 %v37, 4294901760
    %v574 = vsub.f32 %v37, %v573
    %575 = vmatpush.msra.mxu0 %v574
    %v576 = vand.u32 %v36, 4294901760
    %v577 = vsub.f32 %v36, %v576
    %578 = vmatpush.msra.mxu0 %v577
    %v579 = vand.u32 %v35, 4294901760
    %v580 = vsub.f32 %v35, %v579
    %581 = vmatpush.msra.mxu0 %v580
    %v582 = vand.u32 %v18, 4294901760
    %v583 = vsub.f32 %v18, %v582
    %584 = vmatmul.f32.gmra.mxu0 %v583
    %v585 = vpop.f32.mrf.mxu0
    %v586 = vadd.f32 %v532, %v585
    %587 = vdwg.mxu0
    %v588 = vand.u32 %v50, 4294901760
    %589 = vmatpush.msra.mxu0 %v588
    %v590 = vand.u32 %v49, 4294901760
    %591 = vmatpush.msra.mxu0 %v590
    %v592 = vand.u32 %v48, 4294901760
    %593 = vmatpush.msra.mxu0 %v592
    %v594 = vand.u32 %v47, 4294901760
    %595 = vmatpush.msra.mxu0 %v594
    %v596 = vand.u32 %v46, 4294901760
    %597 = vmatpush.msra.mxu0 %v596
    %v598 = vand.u32 %v45, 4294901760
    %599 = vmatpush.msra.mxu0 %v598
    %v600 = vand.u32 %v44, 4294901760
    %601 = vmatpush.msra.mxu0 %v600
    %v602 = vand.u32 %v43, 4294901760
    %603 = vmatpush.msra.mxu0 %v602
    %v604 = vand.u32 %v42, 4294901760
    %605 = vmatpush.msra.mxu0 %v604
    %v606 = vand.u32 %v41, 4294901760
    %607 = vmatpush.msra.mxu0 %v606
    %v608 = vand.u32 %v40, 4294901760
    %609 = vmatpush.msra.mxu0 %v608
    %v610 = vand.u32 %v39, 4294901760
    %611 = vmatpush.msra.mxu0 %v610
    %v612 = vand.u32 %v38, 4294901760
    %613 = vmatpush.msra.mxu0 %v612
    %v614 = vand.u32 %v37, 4294901760
    %615 = vmatpush.msra.mxu0 %v614
    %v616 = vand.u32 %v36, 4294901760
    %617 = vmatpush.msra.mxu0 %v616
    %v618 = vand.u32 %v35, 4294901760
    %619 = vmatpush.msra.mxu0 %v618
    %v620 = vand.u32 %v18, 4294901760
    %v621 = vsub.f32 %v18, %v620
    %v622 = vand.u32 %v621, 4294901760
    %623 = vmatmul.f32.gmra.mxu0 %v622
    %v624 = vpop.f32.mrf.mxu0
    %v625 = vadd.f32 %v586, %v624
    %626 = vdwg.mxu0
    %v627 = vand.u32 %v50, 4294901760
    %v628 = vsub.f32 %v50, %v627
    %v629 = vand.u32 %v628, 4294901760
    %630 = vmatpush.msra.mxu0 %v629
    %v631 = vand.u32 %v49, 4294901760
    %v632 = vsub.f32 %v49, %v631
    %v633 = vand.u32 %v632, 4294901760
    %634 = vmatpush.msra.mxu0 %v633
    %v635 = vand.u32 %v48, 4294901760
    %v636 = vsub.f32 %v48, %v635
    %v637 = vand.u32 %v636, 4294901760
    %638 = vmatpush.msra.mxu0 %v637
    %v639 = vand.u32 %v47, 4294901760
    %v640 = vsub.f32 %v47, %v639
    %v641 = vand.u32 %v640, 4294901760
    %642 = vmatpush.msra.mxu0 %v641
    %v643 = vand.u32 %v46, 4294901760
    %v644 = vsub.f32 %v46, %v643
    %v645 = vand.u32 %v644, 4294901760
    %646 = vmatpush.msra.mxu0 %v645
    %v647 = vand.u32 %v45, 4294901760
    %v648 = vsub.f32 %v45, %v647
    %v649 = vand.u32 %v648, 4294901760
    %650 = vmatpush.msra.mxu0 %v649
    %v651 = vand.u32 %v44, 4294901760
    %v652 = vsub.f32 %v44, %v651
    %v653 = vand.u32 %v652, 4294901760
    %654 = vmatpush.msra.mxu0 %v653
    %v655 = vand.u32 %v43, 4294901760
    %v656 = vsub.f32 %v43, %v655
    %v657 = vand.u32 %v656, 4294901760
    %658 = vmatpush.msra.mxu0 %v657
    %v659 = vand.u32 %v42, 4294901760
    %v660 = vsub.f32 %v42, %v659
    %v661 = vand.u32 %v660, 4294901760
    %662 = vmatpush.msra.mxu0 %v661
    %v663 = vand.u32 %v41, 4294901760
    %v664 = vsub.f32 %v41, %v663
    %v665 = vand.u32 %v664, 4294901760
    %666 = vmatpush.msra.mxu0 %v665
    %v667 = vand.u32 %v40, 4294901760
    %v668 = vsub.f32 %v40, %v667
    %v669 = vand.u32 %v668, 4294901760
    %670 = vmatpush.msra.mxu0 %v669
    %v671 = vand.u32 %v39, 4294901760
    %v672 = vsub.f32 %v39, %v671
    %v673 = vand.u32 %v672, 4294901760
    %674 = vmatpush.msra.mxu0 %v673
    %v675 = vand.u32 %v38, 4294901760
    %v676 = vsub.f32 %v38, %v675
    %v677 = vand.u32 %v676, 4294901760
    %678 = vmatpush.msra.mxu0 %v677
    %v679 = vand.u32 %v37, 4294901760
    %v680 = vsub.f32 %v37, %v679
    %v681 = vand.u32 %v680, 4294901760
    %682 = vmatpush.msra.mxu0 %v681
    %v683 = vand.u32 %v36, 4294901760
    %v684 = vsub.f32 %v36, %v683
    %v685 = vand.u32 %v684, 4294901760
    %686 = vmatpush.msra.mxu0 %v685
    %v687 = vand.u32 %v35, 4294901760
    %v688 = vsub.f32 %v35, %v687
    %v689 = vand.u32 %v688, 4294901760
    %690 = vmatpush.msra.mxu0 %v689
    %v691 = vand.u32 %v18, 4294901760
    %692 = vmatmul.f32.gmra.mxu0 %v691
    %v693 = vpop.f32.mrf.mxu0
    %v694 = vadd.f32 %v625, %v693
    %695 = vdwg.mxu0
    %v696 = vand.u32 %v50, 4294901760
    %697 = vmatpush.msra.mxu0 %v696
    %v698 = vand.u32 %v49, 4294901760
    %699 = vmatpush.msra.mxu0 %v698
    %v700 = vand.u32 %v48, 4294901760
    %701 = vmatpush.msra.mxu0 %v700
    %v702 = vand.u32 %v47, 4294901760
    %703 = vmatpush.msra.mxu0 %v702
    %v704 = vand.u32 %v46, 4294901760
    %705 = vmatpush.msra.mxu0 %v704
    %v706 = vand.u32 %v45, 4294901760
    %707 = vmatpush.msra.mxu0 %v706
    %v708 = vand.u32 %v44, 4294901760
    %709 = vmatpush.msra.mxu0 %v708
    %v710 = vand.u32 %v43, 4294901760
    %711 = vmatpush.msra.mxu0 %v710
    %v712 = vand.u32 %v42, 4294901760
    %713 = vmatpush.msra.mxu0 %v712
    %v714 = vand.u32 %v41, 4294901760
    %715 = vmatpush.msra.mxu0 %v714
    %v716 = vand.u32 %v40, 4294901760
    %717 = vmatpush.msra.mxu0 %v716
    %v718 = vand.u32 %v39, 4294901760
    %719 = vmatpush.msra.mxu0 %v718
    %v720 = vand.u32 %v38, 4294901760
    %721 = vmatpush.msra.mxu0 %v720
    %v722 = vand.u32 %v37, 4294901760
    %723 = vmatpush.msra.mxu0 %v722
    %v724 = vand.u32 %v36, 4294901760
    %725 = vmatpush.msra.mxu0 %v724
    %v726 = vand.u32 %v35, 4294901760
    %727 = vmatpush.msra.mxu0 %v726
    %v728 = vand.u32 %v18, 4294901760
    %729 = vmatmul.f32.gmra.mxu0 %v728
    %v730 = vpop.f32.mrf.mxu0
    %v731 = vadd.f32 %v694, %v730
    %732 = vdwg.mxu0
    %v733 = vmul.f32 %v731, 0.0625
    %v734 = vadd.f32 %v733, 1e-08
    %v735 = vrsqrt.pop %v734
    %v736 = vmul.f32 %v735, %v734
    %v737 = vmul.f32 %v736, %v735
    %v738 = vmul.f32 0.5, %v737
    %v739 = vsub.f32 1.5, %v738
    %v740 = vmul.f32 %v735, %v739
    %vm741 = vweird.f32 %v734
    %vm742 = vweird.f32 %v735
    %vm743 = vmor %vm741, %vm742
    %v744 = vsel %vm743, %v735, %v740
    %v745 = vld [vmem:[%s2] sm:$0xff]
    %v746 = vld [vmem:[%s2 + $0x8] sm:$0xff]
    %v747 = vld [vmem:[%s2 + $0x10] sm:$0xff]
    %v748 = vld [vmem:[%s2 + $0x18] sm:$0xff]
    %vm749 = vcmask 130048
    %v751 = vsel %vm749, %v744, 0
    %753 = vmatpush.msra.mxu0 0.0
    %754 = vmatpush.msra.mxu0 0.0
    %755 = vmatpush.msra.mxu0 0.0
    %756 = vmatpush.msra.mxu0 0.0
    %757 = vmatpush.msra.mxu0 0.0
    %758 = vmatpush.msra.mxu0 0.0
    %759 = vmatpush.msra.mxu0 0.0
    %760 = vmatpush.msra.mxu0 0.0
    %761 = vmatpush.msra.mxu0 0.0
    %762 = vmatpush.msra.mxu0 0.0
    %763 = vmatpush.msra.mxu0 0.0
    %764 = vmatpush.msra.mxu0 0.0
    %765 = vmatpush.msra.mxu0 0.0
    %766 = vmatpush.msra.mxu0 0.0
    %v767 = vand.u32 %v747, 4294901760
    %768 = vmatpush.msra.mxu0 %v767
    %v769 = vand.u32 %v745, 4294901760
    %770 = vmatpush.msra.mxu0 %v769
    %v771 = vand.u32 %v751, 4294901760
    %v772 = vsub.f32 %v751, %v771
    %v773 = vand.u32 %v772, 4294901760
    %v774 = vsub.f32 %v772, %v773
    %v775 = vand.u32 %v774, 4294901760
    %776 = vmatmul.f32.gmra.mxu0 %v775
    %v777 = vpop.f32.mrf.mxu0
    %v778 = vadd.f32 0.0, %v777
    %779 = vdwg.mxu0
    %780 = vmatpush.msra.mxu0 0.0
    %781 = vmatpush.msra.mxu0 0.0
    %782 = vmatpush.msra.mxu0 0.0
    %783 = vmatpush.msra.mxu0 0.0
    %784 = vmatpush.msra.mxu0 0.0
    %785 = vmatpush.msra.mxu0 0.0
    %786 = vmatpush.msra.mxu0 0.0
    %787 = vmatpush.msra.mxu0 0.0
    %788 = vmatpush.msra.mxu0 0.0
    %789 = vmatpush.msra.mxu0 0.0
    %790 = vmatpush.msra.mxu0 0.0
    %791 = vmatpush.msra.mxu0 0.0
    %792 = vmatpush.msra.mxu0 0.0
    %793 = vmatpush.msra.mxu0 0.0
    %v794 = vand.u32 %v747, 4294901760
    %v795 = vsub.f32 %v747, %v794
    %v796 = vand.u32 %v795, 4294901760
    %v797 = vsub.f32 %v795, %v796
    %v798 = vand.u32 %v797, 4294901760
    %799 = vmatpush.msra.mxu0 %v798
    %v800 = vand.u32 %v745, 4294901760
    %v801 = vsub.f32 %v745, %v800
    %v802 = vand.u32 %v801, 4294901760
    %v803 = vsub.f32 %v801, %v802
    %v804 = vand.u32 %v803, 4294901760
    %805 = vmatpush.msra.mxu0 %v804
    %v806 = vand.u32 %v751, 4294901760
    %807 = vmatmul.f32.gmra.mxu0 %v806
    %v808 = vpop.f32.mrf.mxu0
    %v809 = vadd.f32 %v778, %v808
    %810 = vdwg.mxu0
    %811 = vmatpush.msra.mxu0 0.0
    %812 = vmatpush.msra.mxu0 0.0
    %813 = vmatpush.msra.mxu0 0.0
    %814 = vmatpush.msra.mxu0 0.0
    %815 = vmatpush.msra.mxu0 0.0
    %816 = vmatpush.msra.mxu0 0.0
    %817 = vmatpush.msra.mxu0 0.0
    %818 = vmatpush.msra.mxu0 0.0
    %819 = vmatpush.msra.mxu0 0.0
    %820 = vmatpush.msra.mxu0 0.0
    %821 = vmatpush.msra.mxu0 0.0
    %822 = vmatpush.msra.mxu0 0.0
    %823 = vmatpush.msra.mxu0 0.0
    %824 = vmatpush.msra.mxu0 0.0
    %v825 = vand.u32 %v747, 4294901760
    %v826 = vsub.f32 %v747, %v825
    %827 = vmatpush.msra.mxu0 %v826
    %v828 = vand.u32 %v745, 4294901760
    %v829 = vsub.f32 %v745, %v828
    %830 = vmatpush.msra.mxu0 %v829
    %v831 = vand.u32 %v751, 4294901760
    %v832 = vsub.f32 %v751, %v831
    %833 = vmatmul.f32.gmra.mxu0 %v832
    %v834 = vpop.f32.mrf.mxu0
    %v835 = vadd.f32 %v809, %v834
    %836 = vdwg.mxu0
    %837 = vmatpush.msra.mxu0 0.0
    %838 = vmatpush.msra.mxu0 0.0
    %839 = vmatpush.msra.mxu0 0.0
    %840 = vmatpush.msra.mxu0 0.0
    %841 = vmatpush.msra.mxu0 0.0
    %842 = vmatpush.msra.mxu0 0.0
    %843 = vmatpush.msra.mxu0 0.0
    %844 = vmatpush.msra.mxu0 0.0
    %845 = vmatpush.msra.mxu0 0.0
    %846 = vmatpush.msra.mxu0 0.0
    %847 = vmatpush.msra.mxu0 0.0
    %848 = vmatpush.msra.mxu0 0.0
    %849 = vmatpush.msra.mxu0 0.0
    %850 = vmatpush.msra.mxu0 0.0
    %v851 = vand.u32 %v747, 4294901760
    %852 = vmatpush.msra.mxu0 %v851
    %v853 = vand.u32 %v745, 4294901760
    %854 = vmatpush.msra.mxu0 %v853
    %v855 = vand.u32 %v751, 4294901760
    %v856 = vsub.f32 %v751, %v855
    %v857 = vand.u32 %v856, 4294901760
    %858 = vmatmul.f32.gmra.mxu0 %v857
    %v859 = vpop.f32.mrf.mxu0
    %v860 = vadd.f32 %v835, %v859
    %861 = vdwg.mxu0
    %862 = vmatpush.msra.mxu0 0.0
    %863 = vmatpush.msra.mxu0 0.0
    %864 = vmatpush.msra.mxu0 0.0
    %865 = vmatpush.msra.mxu0 0.0
    %866 = vmatpush.msra.mxu0 0.0
    %867 = vmatpush.msra.mxu0 0.0
    %868 = vmatpush.msra.mxu0 0.0
    %869 = vmatpush.msra.mxu0 0.0
    %870 = vmatpush.msra.mxu0 0.0
    %871 = vmatpush.msra.mxu0 0.0
    %872 = vmatpush.msra.mxu0 0.0
    %873 = vmatpush.msra.mxu0 0.0
    %874 = vmatpush.msra.mxu0 0.0
    %875 = vmatpush.msra.mxu0 0.0
    %v876 = vand.u32 %v747, 4294901760
    %v877 = vsub.f32 %v747, %v876
    %v878 = vand.u32 %v877, 4294901760
    %879 = vmatpush.msra.mxu0 %v878
    %v880 = vand.u32 %v745, 4294901760
    %v881 = vsub.f32 %v745, %v880
    %v882 = vand.u32 %v881, 4294901760
    %883 = vmatpush.msra.mxu0 %v882
    %v884 = vand.u32 %v751, 4294901760
    %885 = vmatmul.f32.gmra.mxu0 %v884
    %v886 = vpop.f32.mrf.mxu0
    %v887 = vadd.f32 %v860, %v886
    %888 = vdwg.mxu0
    %889 = vmatpush.msra.mxu0 0.0
    %890 = vmatpush.msra.mxu0 0.0
    %891 = vmatpush.msra.mxu0 0.0
    %892 = vmatpush.msra.mxu0 0.0
    %893 = vmatpush.msra.mxu0 0.0
    %894 = vmatpush.msra.mxu0 0.0
    %895 = vmatpush.msra.mxu0 0.0
    %896 = vmatpush.msra.mxu0 0.0
    %897 = vmatpush.msra.mxu0 0.0
    %898 = vmatpush.msra.mxu0 0.0
    %899 = vmatpush.msra.mxu0 0.0
    %900 = vmatpush.msra.mxu0 0.0
    %901 = vmatpush.msra.mxu0 0.0
    %902 = vmatpush.msra.mxu0 0.0
    %v903 = vand.u32 %v747, 4294901760
    %904 = vmatpush.msra.mxu0 %v903
    %v905 = vand.u32 %v745, 4294901760
    %906 = vmatpush.msra.mxu0 %v905
    %v907 = vand.u32 %v751, 4294901760
    %908 = vmatmul.f32.gmra.mxu0 %v907
    %v909 = vpop.f32.mrf.mxu0
    %v910 = vadd.f32 %v887, %v909
    %911 = vdwg.mxu0
    %912 = vmatpush.msra.mxu0 0.0
    %913 = vmatpush.msra.mxu0 0.0
    %914 = vmatpush.msra.mxu0 0.0
    %915 = vmatpush.msra.mxu0 0.0
    %916 = vmatpush.msra.mxu0 0.0
    %917 = vmatpush.msra.mxu0 0.0
    %918 = vmatpush.msra.mxu0 0.0
    %919 = vmatpush.msra.mxu0 0.0
    %920 = vmatpush.msra.mxu0 0.0
    %921 = vmatpush.msra.mxu0 0.0
    %922 = vmatpush.msra.mxu0 0.0
    %923 = vmatpush.msra.mxu0 0.0
    %924 = vmatpush.msra.mxu0 0.0
    %925 = vmatpush.msra.mxu0 0.0
    %v926 = vand.u32 %v748, 4294901760
    %927 = vmatpush.msra.mxu0 %v926
    %v928 = vand.u32 %v746, 4294901760
    %929 = vmatpush.msra.mxu0 %v928
    %v930 = vand.u32 %v751, 4294901760
    %v931 = vsub.f32 %v751, %v930
    %v932 = vand.u32 %v931, 4294901760
    %v933 = vsub.f32 %v931, %v932
    %v934 = vand.u32 %v933, 4294901760
    %935 = vmatmul.f32.gmra.mxu0 %v934
    %v936 = vpop.f32.mrf.mxu0
    %v937 = vadd.f32 0.0, %v936
    %938 = vdwg.mxu0
    %939 = vmatpush.msra.mxu0 0.0
    %940 = vmatpush.msra.mxu0 0.0
    %941 = vmatpush.msra.mxu0 0.0
    %942 = vmatpush.msra.mxu0 0.0
    %943 = vmatpush.msra.mxu0 0.0
    %944 = vmatpush.msra.mxu0 0.0
    %945 = vmatpush.msra.mxu0 0.0
    %946 = vmatpush.msra.mxu0 0.0
    %947 = vmatpush.msra.mxu0 0.0
    %948 = vmatpush.msra.mxu0 0.0
    %949 = vmatpush.msra.mxu0 0.0
    %950 = vmatpush.msra.mxu0 0.0
    %951 = vmatpush.msra.mxu0 0.0
    %952 = vmatpush.msra.mxu0 0.0
    %v953 = vand.u32 %v748, 4294901760
    %v954 = vsub.f32 %v748, %v953
    %v955 = vand.u32 %v954, 4294901760
    %v956 = vsub.f32 %v954, %v955
    %v957 = vand.u32 %v956, 4294901760
    %958 = vmatpush.msra.mxu0 %v957
    %v959 = vand.u32 %v746, 4294901760
    %v960 = vsub.f32 %v746, %v959
    %v961 = vand.u32 %v960, 4294901760
    %v962 = vsub.f32 %v960, %v961
    %v963 = vand.u32 %v962, 4294901760
    %964 = vmatpush.msra.mxu0 %v963
    %v965 = vand.u32 %v751, 4294901760
    %966 = vmatmul.f32.gmra.mxu0 %v965
    %v967 = vpop.f32.mrf.mxu0
    %v968 = vadd.f32 %v937, %v967
    %969 = vdwg.mxu0
    %970 = vmatpush.msra.mxu0 0.0
    %971 = vmatpush.msra.mxu0 0.0
    %972 = vmatpush.msra.mxu0 0.0
    %973 = vmatpush.msra.mxu0 0.0
    %974 = vmatpush.msra.mxu0 0.0
    %975 = vmatpush.msra.mxu0 0.0
    %976 = vmatpush.msra.mxu0 0.0
    %977 = vmatpush.msra.mxu0 0.0
    %978 = vmatpush.msra.mxu0 0.0
    %979 = vmatpush.msra.mxu0 0.0
    %980 = vmatpush.msra.mxu0 0.0
    %981 = vmatpush.msra.mxu0 0.0
    %982 = vmatpush.msra.mxu0 0.0
    %983 = vmatpush.msra.mxu0 0.0
    %v984 = vand.u32 %v748, 4294901760
    %v985 = vsub.f32 %v748, %v984
    %986 = vmatpush.msra.mxu0 %v985
    %v987 = vand.u32 %v746, 4294901760
    %v988 = vsub.f32 %v746, %v987
    %989 = vmatpush.msra.mxu0 %v988
    %v990 = vand.u32 %v751, 4294901760
    %v991 = vsub.f32 %v751, %v990
    %992 = vmatmul.f32.gmra.mxu0 %v991
    %v993 = vpop.f32.mrf.mxu0
    %v994 = vadd.f32 %v968, %v993
    %995 = vdwg.mxu0
    %996 = vmatpush.msra.mxu0 0.0
    %997 = vmatpush.msra.mxu0 0.0
    %998 = vmatpush.msra.mxu0 0.0
    %999 = vmatpush.msra.mxu0 0.0
    %1000 = vmatpush.msra.mxu0 0.0
    %1001 = vmatpush.msra.mxu0 0.0
    %1002 = vmatpush.msra.mxu0 0.0
    %1003 = vmatpush.msra.mxu0 0.0
    %1004 = vmatpush.msra.mxu0 0.0
    %1005 = vmatpush.msra.mxu0 0.0
    %1006 = vmatpush.msra.mxu0 0.0
    %1007 = vmatpush.msra.mxu0 0.0
    %1008 = vmatpush.msra.mxu0 0.0
    %1009 = vmatpush.msra.mxu0 0.0
    %v1010 = vand.u32 %v748, 4294901760
    %1011 = vmatpush.msra.mxu0 %v1010
    %v1012 = vand.u32 %v746, 4294901760
    %1013 = vmatpush.msra.mxu0 %v1012
    %v1014 = vand.u32 %v751, 4294901760
    %v1015 = vsub.f32 %v751, %v1014
    %v1016 = vand.u32 %v1015, 4294901760
    %1017 = vmatmul.f32.gmra.mxu0 %v1016
    %v1018 = vpop.f32.mrf.mxu0
    %v1019 = vadd.f32 %v994, %v1018
    %1020 = vdwg.mxu0
    %1021 = vmatpush.msra.mxu0 0.0
    %1022 = vmatpush.msra.mxu0 0.0
    %1023 = vmatpush.msra.mxu0 0.0
    %1024 = vmatpush.msra.mxu0 0.0
    %1025 = vmatpush.msra.mxu0 0.0
    %1026 = vmatpush.msra.mxu0 0.0
    %1027 = vmatpush.msra.mxu0 0.0
    %1028 = vmatpush.msra.mxu0 0.0
    %1029 = vmatpush.msra.mxu0 0.0
    %1030 = vmatpush.msra.mxu0 0.0
    %1031 = vmatpush.msra.mxu0 0.0
    %1032 = vmatpush.msra.mxu0 0.0
    %1033 = vmatpush.msra.mxu0 0.0
    %1034 = vmatpush.msra.mxu0 0.0
    %v1035 = vand.u32 %v748, 4294901760
    %v1036 = vsub.f32 %v748, %v1035
    %v1037 = vand.u32 %v1036, 4294901760
    %1038 = vmatpush.msra.mxu0 %v1037
    %v1039 = vand.u32 %v746, 4294901760
    %v1040 = vsub.f32 %v746, %v1039
    %v1041 = vand.u32 %v1040, 4294901760
    %1042 = vmatpush.msra.mxu0 %v1041
    %v1043 = vand.u32 %v751, 4294901760
    %1044 = vmatmul.f32.gmra.mxu0 %v1043
    %v1045 = vpop.f32.mrf.mxu0
    %v1046 = vadd.f32 %v1019, %v1045
    %1047 = vdwg.mxu0
    %1048 = vmatpush.msra.mxu0 0.0
    %1049 = vmatpush.msra.mxu0 0.0
    %1050 = vmatpush.msra.mxu0 0.0
    %1051 = vmatpush.msra.mxu0 0.0
    %1052 = vmatpush.msra.mxu0 0.0
    %1053 = vmatpush.msra.mxu0 0.0
    %1054 = vmatpush.msra.mxu0 0.0
    %1055 = vmatpush.msra.mxu0 0.0
    %1056 = vmatpush.msra.mxu0 0.0
    %1057 = vmatpush.msra.mxu0 0.0
    %1058 = vmatpush.msra.mxu0 0.0
    %1059 = vmatpush.msra.mxu0 0.0
    %1060 = vmatpush.msra.mxu0 0.0
    %1061 = vmatpush.msra.mxu0 0.0
    %v1062 = vand.u32 %v748, 4294901760
    %1063 = vmatpush.msra.mxu0 %v1062
    %v1064 = vand.u32 %v746, 4294901760
    %1065 = vmatpush.msra.mxu0 %v1064
    %v1066 = vand.u32 %v751, 4294901760
    %1067 = vmatmul.f32.gmra.mxu0 %v1066
    %v1068 = vpop.f32.mrf.mxu0
    %v1069 = vadd.f32 %v1046, %v1068
    %1070 = vdwg.mxu0
    %v1071 = vmul.f32 %v15, %v910
    %v1072 = vmul.f32 %v16, %v1069
    %1073 = vst [vmem:[#allocation2] sm:$0xff] %v1071
    %1074 = vst [vmem:[#allocation2 + $0x8] sm:$0xff] %v1072
    // Predicated region
    $region14: #{tpu_custom_call.1} parent=1 // pred_check
      _
    $region15: #{tpu_custom_call.1} parent=1 // pred_check_branch
      %1076 = sbr.rel (0) target = $region17
    $region16: #{tpu_custom_call.1} parent=1 // pred_region
      %1078 = vsyncadd [#allocation3], 0
      %s1080 = sshll.u32 [#allocation2], 4
      %s1081 = int_to_ptr.vmem [resolvable:$true] %s1080
      %s1082 = sshll.u32 %s3, 4
      %s1083 = int_to_ptr.hbm [resolvable:$true] %s1082
      %1085 = dma.vmem_to_hbm [thread:$0]  %s1081, 256, %s1083, [#allocation3]
    $region17: #{tpu_custom_call.1} parent=1 // pred_fallthru
      _
    // Predicated region
    $region18: #{tpu_custom_call.1} parent=1 // pred_check
      _
    $region19: #{tpu_custom_call.1} parent=1 // pred_check_branch
      %1087 = sbr.rel (0) target = $region21
    $region20: #{tpu_custom_call.1} parent=1 // pred_region
      %1089 = dma.done [#allocation3], 256
    $region21: #{tpu_custom_call.1} parent=1 // pred_fallthru
      _
    %1090 = vsyncpa [#allocation3], 1

</llo_original>
